<compile_context>
chip_gen: v7x
topology: tpu7x:2x2x1
jax: 0.10.0
libtpu: 0.0.40
codegen_flags: <defaults>
</compile_context>

<pallas_src>
import functools

import jax
import jax.numpy as jnp
from jax.experimental import pallas as pl
from jax.experimental.pallas import tpu as pltpu


def _round_up(x: int, m: int) -> int:
    return ((x + m - 1) // m) * m


def _simclr_kernel(ziq_ref, zjq_ref, zik_ref, zjk_ref, out_ref,
                   m_i, l_i, m_j, l_j, pos_sc, ziq_sc, zjq_sc, *,
                   temperature: float, normalize: bool, gemm_dtype,
                   block: int, n_valid: int, pad_rows: bool, pad_cols: bool):
    qi = pl.program_id(0)          # row block of the batch ("parallel")
    kj = pl.program_id(1)          # column block of the batch ("arbitrary", last)
    nk = pl.num_programs(1)
    t = block
    f32 = jnp.float32
    neg_big = f32(-1e30)
    inv_t = f32(1.0 / float(temperature))
    # Fold sqrt(1/temperature) into both GEMM operands: S already includes 1/T
    # and no per-element multiply of the (t, t) tiles is needed.
    scale = f32((1.0 / float(temperature)) ** 0.5)

    def norm_f32(ref):
        x = ref[...].astype(f32)
        if normalize:
            # F.normalize(p=2, eps=1e-12): x / max(||x||, eps)  ==
            # x * rsqrt(max(||x||^2, eps^2))   (rsqrt goes to the EUP slot).
            x = x * jax.lax.rsqrt(
                jnp.maximum(jnp.sum(x * x, axis=-1, keepdims=True), f32(1e-24)))
        return x

    @pl.when(kj == 0)
    def _init():
        # Prepare the row blocks once per qi; they stay resident (and cached in
        # scratch) across the whole column sweep.
        ziq_f = norm_f32(ziq_ref)                    # (t, Dp) f32, view i
        zjq_f = norm_f32(zjq_ref)                    # (t, Dp) f32, view j
        ziq_sc[...] = (ziq_f * scale).astype(gemm_dtype)
        zjq_sc[...] = (zjq_f * scale).astype(gemm_dtype)
        # Positives: diag(ab) == diag(ba) == <zi_r, zj_r> / T, computed in f32
        # before the GEMM-dtype cast.  O(t * D), no (t, t) select / row-reduce.
        pos_sc[...] = jnp.sum(ziq_f * zjq_f, axis=-1, keepdims=True) * inv_t
        m_i[...] = jnp.full((t, 1), neg_big, f32)
        l_i[...] = jnp.zeros((t, 1), f32)
        m_j[...] = jnp.full((t, 1), neg_big, f32)
        l_j[...] = jnp.zeros((t, 1), f32)

    ziq = ziq_sc[...]                                # (t, Dp) gemm dtype, scaled
    zjq = zjq_sc[...]
    zik = (norm_f32(zik_ref) * scale).astype(gemm_dtype)   # column blocks
    zjk = (norm_f32(zjk_ref) * scale).astype(gemm_dtype)

    # Four (t, t) tiles of the fused similarity matrix; bf16 MXU, f32 acc.
    dn = (((1,), (1,)), ((), ()))                    # contract last dims: A @ B.T
    s_aa = jax.lax.dot_general(ziq, zik, dn, preferred_element_type=f32)
    s_ab = jax.lax.dot_general(ziq, zjk, dn, preferred_element_type=f32)
    s_ba = jax.lax.dot_general(zjq, zik, dn, preferred_element_type=f32)
    s_bb = jax.lax.dot_general(zjq, zjk, dn, preferred_element_type=f32)

    # Additive -1e30 penalties.  Self-similarity diagonal applies only to
    # aa / bb and only actually hits on diagonal grid cells (qi == kj); the
    # padding-column penalty (alignment padding only) applies to all four.
    row_g = jax.lax.broadcasted_iota(jnp.int32, (t, t), 0) + qi * t
    col_g = jax.lax.broadcasted_iota(jnp.int32, (t, t), 1) + kj * t
    self_pen = jnp.where(row_g == col_g, neg_big, f32(0.0))
    if pad_cols:
        col_g1 = jax.lax.broadcasted_iota(jnp.int32, (1, t), 1) + kj * t
        col_pen = jnp.where(col_g1 >= n_valid, neg_big, f32(0.0))   # (1, t)
        self_pen = self_pen + col_pen
        s_ab = s_ab + col_pen
        s_ba = s_ba + col_pen
    s_aa = s_aa + self_pen
    s_bb = s_bb + self_pen

    def online_lse(m_ref, l_ref, s_self, s_cross):
        # Per-row logit set for this column block: {self off-diagonals} U
        # {entire cross row}; running max / running sum across column blocks.
        m_prev = m_ref[...]
        m_new = jnp.maximum(
            m_prev,
            jnp.maximum(jnp.max(s_self, axis=-1, keepdims=True),
                        jnp.max(s_cross, axis=-1, keepdims=True)))
        p = (jnp.sum(jnp.exp(s_self - m_new), axis=-1, keepdims=True)
             + jnp.sum(jnp.exp(s_cross - m_new), axis=-1, keepdims=True))
        l_ref[...] = jnp.exp(m_prev - m_new) * l_ref[...] + p
        m_ref[...] = m_new

    online_lse(m_i, l_i, s_aa, s_ab)       # rows of view i
    online_lse(m_j, l_j, s_bb, s_ba)       # rows of view j

    @pl.when(kj == nk - 1)
    def _finalize():
        pos = pos_sc[...]
        li = m_i[...] + jnp.log(l_i[...]) - pos      # (t, 1)
        lj = m_j[...] + jnp.log(l_j[...]) - pos
        if pad_rows:
            rvalid = (jax.lax.broadcasted_iota(jnp.int32, (t, 1), 0)
                      + qi * t) < n_valid
            li = jnp.where(rvalid, li, f32(0.0))
            lj = jnp.where(rvalid, lj, f32(0.0))
        out_ref[:, 0:1] = li
        out_ref[:, 1:2] = lj


def simclr_criterion(z_i, z_j, *, temperature: float = 1.0, normalize: bool = True,
                     block_size: int = 256, gemm_dtype=jnp.bfloat16):
    """NT-Xent loss between two (B, D) representations. Returns a scalar f32.

    block_size: batch tile (rows == cols). 256 suits v6e/v7x (2x256 MXU); use
    128 on v5e.
    """
    assert z_i.ndim == 2 and z_i.shape == z_j.shape
    B, D = z_i.shape

    # Lane-align the feature dim (zero padding is exact for dot products and
    # L2 norms) and sublane-align the batch dim (multiple of 16 for bf16).
    Dp = _round_up(max(D, 128), 128)
    t = min(_round_up(int(block_size), 16), _round_up(B, 16))
    Bp = _round_up(B, t)
    pad = Bp != B

    def host_prep(z):
        z = jnp.pad(z, ((0, Bp - B), (0, Dp - D)))
        # Single pad+cast to the (smaller) GEMM dtype; normalization stays in
        # f32 inside the kernel.
        return z.astype(gemm_dtype)

    zi_p = host_prep(z_i)
    zj_p = host_prep(z_j)

    nq = Bp // t
    grid = (nq, nq)

    kernel = functools.partial(
        _simclr_kernel,
        temperature=float(temperature), normalize=bool(normalize),
        gemm_dtype=gemm_dtype, block=t, n_valid=B,
        pad_rows=pad, pad_cols=pad)

    in_specs = [
        pl.BlockSpec((t, Dp), lambda qi, kj: (qi, 0)),   # z_i row block
        pl.BlockSpec((t, Dp), lambda qi, kj: (qi, 0)),   # z_j row block
        pl.BlockSpec((t, Dp), lambda qi, kj: (kj, 0)),   # z_i column block
        pl.BlockSpec((t, Dp), lambda qi, kj: (kj, 0)),   # z_j column block
    ]
    out_spec = pl.BlockSpec((t, 2), lambda qi, kj: (qi, 0))

    # Explicit scoped-VMEM budget derived from the tiles (double-buffered
    # inputs + f32 operand intermediates + four (t, t) f32 tiles + cached row
    # blocks + small scratch + margin).
    # TODO(synk): for very large D a third (K) grid axis over the feature dim
    # would be needed; not done here.
    itemsize = jnp.dtype(gemm_dtype).itemsize
    est = (4 * 2 * t * Dp * itemsize          # double-buffered input tiles
           + 4 * t * Dp * 4                   # f32 normalization intermediates
           + 2 * t * Dp * itemsize            # cached scaled row blocks
           + 4 * t * t * 4                    # four (t, t) f32 similarity tiles
           + 6 * t * 128 * 4                  # (t, 1) scratch (lane-padded)
           + (4 << 20))
    vmem_limit = int(min(max(est, 32 << 20), 64 << 20))

    per_row = pl.pallas_call(
        kernel,
        out_shape=jax.ShapeDtypeStruct((Bp, 2), jnp.float32),
        grid_spec=pltpu.PrefetchScalarGridSpec(
            num_scalar_prefetch=0,
            grid=grid,
            in_specs=in_specs,
            out_specs=out_spec,
            scratch_shapes=[pltpu.VMEM((t, 1), jnp.float32),   # m_i
                            pltpu.VMEM((t, 1), jnp.float32),   # l_i
                            pltpu.VMEM((t, 1), jnp.float32),   # m_j
                            pltpu.VMEM((t, 1), jnp.float32),   # l_j
                            pltpu.VMEM((t, 1), jnp.float32),   # pos
                            pltpu.VMEM((t, Dp), gemm_dtype),   # cached zi row
                            pltpu.VMEM((t, Dp), gemm_dtype)]), # cached zj row
        compiler_params=pltpu.CompilerParams(
            dimension_semantics=("parallel", "arbitrary"),
            vmem_limit_bytes=vmem_limit),
    )(zi_p, zj_p, zi_p, zj_p)

    # Tiny final reduction (padded rows were zeroed in-kernel).
    return jnp.sum(per_row) / jnp.float32(2 * B)


def simclr_reference(z_i, z_j, temperature=1.0, normalize=True):
    """Pure-JAX f32 reference mirroring the PyTorch forward exactly."""
    z_i = jnp.asarray(z_i, jnp.float32)
    z_j = jnp.asarray(z_j, jnp.float32)
    if normalize:
        z_i = z_i / jnp.maximum(jnp.linalg.norm(z_i, axis=-1, keepdims=True), 1e-12)
        z_j = z_j / jnp.maximum(jnp.linalg.norm(z_j, axis=-1, keepdims=True), 1e-12)
    b = z_i.shape[0]
    aa = z_i @ z_i.T / temperature
    bb = z_j @ z_j.T / temperature
    ab = z_i @ z_j.T / temperature
    ba = z_j @ z_i.T / temperature
    mask = ~jnp.eye(b, dtype=bool)
    pos = jnp.concatenate([jnp.diag(ab), jnp.diag(ba)])[:, None]
    aa_n = aa[mask].reshape(b, -1)
    bb_n = bb[mask].reshape(b, -1)
    ab_n = ab[mask].reshape(b, -1)
    ba_n = ba[mask].reshape(b, -1)
    neg = jnp.concatenate(
        [jnp.concatenate([aa_n, ab_n], axis=1),
         jnp.concatenate([ba_n, bb_n], axis=1)], axis=0)
    logits = jnp.concatenate([pos, neg], axis=1)
    return jnp.mean(jax.nn.logsumexp(logits, axis=1) - logits[:, 0])


if __name__ == "__main__":
    key = jax.random.PRNGKey(0)
    k1, k2, k3, k4 = jax.random.split(key, 4)

    def check(got, want, tol, name):
        got = float(got)
        want = float(want)
        assert abs(got - want) <= tol + tol * abs(want), (name, got, want)

    # Case 1: module-like small shapes (batch=8, hidden=32).
    B, D = 8, 32
    z_i = jax.random.normal(k1, (B, D), dtype=jnp.float32)
    z_j = jax.random.normal(k2, (B, D), dtype=jnp.float32)
    want1 = simclr_reference(z_i, z_j, temperature=0.5, normalize=True)

    got_f32 = simclr_criterion(z_i, z_j, temperature=0.5, normalize=True,
                               gemm_dtype=jnp.float32)
    jax.block_until_ready(got_f32)
    check(got_f32, want1, 1e-4, "f32 gemm")

    got_bf16 = simclr_criterion(z_i, z_j, temperature=0.5, normalize=True,
                                gemm_dtype=jnp.bfloat16)
    jax.block_until_ready(got_bf16)
    check(got_bf16, want1, 3e-2, "bf16 gemm")

    # Case 2: multi-block grid with row/column alignment padding (B=24, t=16).
    B2, D2 = 24, 72
    z_i2 = jax.random.normal(k3, (B2, D2), dtype=jnp.float32)
    z_j2 = jax.random.normal(k4, (B2, D2), dtype=jnp.float32)
    want2 = simclr_reference(z_i2, z_j2, temperature=1.0, normalize=True)
    got2 = simclr_criterion(z_i2, z_j2, temperature=1.0, normalize=True,
                            block_size=16, gemm_dtype=jnp.float32)
    jax.block_until_ready(got2)
    check(got2, want2, 1e-4, "tiled multi-block")

    # Case 3: normalize=False branch (small magnitudes so logits stay modest).
    z_i3, z_j3 = z_i * 0.15, z_j * 0.15
    want3 = simclr_reference(z_i3, z_j3, temperature=1.0, normalize=False)
    got3 = simclr_criterion(z_i3, z_j3, temperature=1.0, normalize=False,
                            gemm_dtype=jnp.float32)
    jax.block_until_ready(got3)
    check(got3, want3, 1e-4, "no-normalize")

    print("KERNEL_OK")
</pallas_src>

<mosaic_0001>
module attributes {stable_mosaic.version = 11 : i64} {
  func.func @_simclr_kernel(%arg0: i32, %arg1: i32, %arg2: memref<16x128xf32, #tpu.memory_space<vmem>>, %arg3: memref<16x128xf32, #tpu.memory_space<vmem>>, %arg4: memref<16x128xf32, #tpu.memory_space<vmem>>, %arg5: memref<16x128xf32, #tpu.memory_space<vmem>>, %arg6: memref<16x2xf32, #tpu.memory_space<vmem>>, %arg7: memref<16x1xf32, #tpu.memory_space<vmem>>, %arg8: memref<16x1xf32, #tpu.memory_space<vmem>>, %arg9: memref<16x1xf32, #tpu.memory_space<vmem>>, %arg10: memref<16x1xf32, #tpu.memory_space<vmem>>, %arg11: memref<16x1xf32, #tpu.memory_space<vmem>>, %arg12: memref<16x128xf32, #tpu.memory_space<vmem>>, %arg13: memref<16x128xf32, #tpu.memory_space<vmem>>) attributes {dimension_semantics = [#tpu.dimension_semantics<parallel>, #tpu.dimension_semantics<arbitrary>], iteration_bounds = array<i64: 1, 1>, scalar_prefetch = 0 : i64, scratch_operands = 7 : i64, tpu.core_type = #tpu.core_type<tc>, window_params = [{transform_indices = @transform_0, window_bounds = array<i64: 16, 128>}, {transform_indices = @transform_1, window_bounds = array<i64: 16, 128>}, {transform_indices = @transform_2, window_bounds = array<i64: 16, 128>}, {transform_indices = @transform_3, window_bounds = array<i64: 16, 128>}, {transform_indices = @transform_4, window_bounds = array<i64: 16, 2>}]} {
    %c0_i32 = arith.constant 0 : i32
    %0 = arith.cmpi eq, %arg1, %c0_i32 : i32
    %1 = arith.extui %0 : i1 to i32
    %cst = arith.constant 1.41421354 : f32
    %cst_0 = arith.constant 2.000000e+00 : f32
    %cst_1 = arith.constant -1.000000e+30 : f32
    %c0_i32_2 = arith.constant 0 : i32
    %2 = arith.cmpi ne, %1, %c0_i32_2 : i32
    scf.if %2 {
      %c0_52 = arith.constant 0 : index
      %c0_53 = arith.constant 0 : index
      %113 = vector.load %arg2[%c0_52, %c0_53] : memref<16x128xf32, #tpu.memory_space<vmem>>, vector<16x128xf32>
      %114 = arith.mulf %113, %113 : vector<16x128xf32>
      %cst_54 = arith.constant dense<0.000000e+00> : vector<16xf32>
      %115 = vector.multi_reduction <add>, %114, %cst_54 [1] : vector<16x128xf32> to vector<16xf32>
      %116 = vector.shape_cast %115 : vector<16xf32> to vector<16x1xf32>
      %cst_55 = arith.constant 1.000000e-24 : f32
      %117 = vector.broadcast %cst_55 : f32 to vector<16x1xf32>
      %118 = arith.maximumf %116, %117 : vector<16x1xf32>
      %119 = math.rsqrt %118 : vector<16x1xf32>
      %120 = vector.broadcast %119 : vector<16x1xf32> to vector<16x128xf32>
      %121 = arith.mulf %113, %120 : vector<16x128xf32>
      %c0_56 = arith.constant 0 : index
      %c0_57 = arith.constant 0 : index
      %122 = vector.load %arg3[%c0_56, %c0_57] : memref<16x128xf32, #tpu.memory_space<vmem>>, vector<16x128xf32>
      %123 = arith.mulf %122, %122 : vector<16x128xf32>
      %cst_58 = arith.constant dense<0.000000e+00> : vector<16xf32>
      %124 = vector.multi_reduction <add>, %123, %cst_58 [1] : vector<16x128xf32> to vector<16xf32>
      %125 = vector.shape_cast %124 : vector<16xf32> to vector<16x1xf32>
      %cst_59 = arith.constant 1.000000e-24 : f32
      %126 = vector.broadcast %cst_59 : f32 to vector<16x1xf32>
      %127 = arith.maximumf %125, %126 : vector<16x1xf32>
      %128 = math.rsqrt %127 : vector<16x1xf32>
      %129 = vector.broadcast %128 : vector<16x1xf32> to vector<16x128xf32>
      %130 = arith.mulf %122, %129 : vector<16x128xf32>
      %131 = vector.broadcast %cst : f32 to vector<16x128xf32>
      %132 = arith.mulf %121, %131 : vector<16x128xf32>
      %c0_60 = arith.constant 0 : index
      %c0_61 = arith.constant 0 : index
      %133 = vector.load %arg12[%c0_60, %c0_61] : memref<16x128xf32, #tpu.memory_space<vmem>>, vector<16x128xf32>
      tpu.vector_store %arg12[%c0_60, %c0_61], %132 {strides = array<i32>} : memref<16x128xf32, #tpu.memory_space<vmem>>, vector<16x128xf32>,
      %134 = vector.broadcast %cst : f32 to vector<16x128xf32>
      %135 = arith.mulf %130, %134 : vector<16x128xf32>
      %c0_62 = arith.constant 0 : index
      %c0_63 = arith.constant 0 : index
      %136 = vector.load %arg13[%c0_62, %c0_63] : memref<16x128xf32, #tpu.memory_space<vmem>>, vector<16x128xf32>
      tpu.vector_store %arg13[%c0_62, %c0_63], %135 {strides = array<i32>} : memref<16x128xf32, #tpu.memory_space<vmem>>, vector<16x128xf32>,
      %137 = arith.mulf %121, %130 : vector<16x128xf32>
      %cst_64 = arith.constant dense<0.000000e+00> : vector<16xf32>
      %138 = vector.multi_reduction <add>, %137, %cst_64 [1] : vector<16x128xf32> to vector<16xf32>
      %139 = vector.shape_cast %138 : vector<16xf32> to vector<16x1xf32>
      %140 = vector.broadcast %cst_0 : f32 to vector<16x1xf32>
      %141 = arith.mulf %139, %140 : vector<16x1xf32>
      %c0_65 = arith.constant 0 : index
      %c0_66 = arith.constant 0 : index
      %142 = vector.load %arg11[%c0_65, %c0_66] : memref<16x1xf32, #tpu.memory_space<vmem>>, vector<16x1xf32>
      tpu.vector_store %arg11[%c0_65, %c0_66], %141 {strides = array<i32>} : memref<16x1xf32, #tpu.memory_space<vmem>>, vector<16x1xf32>,
      %143 = vector.broadcast %cst_1 : f32 to vector<16x1xf32>
      %c0_67 = arith.constant 0 : index
      %c0_68 = arith.constant 0 : index
      %144 = vector.load %arg7[%c0_67, %c0_68] : memref<16x1xf32, #tpu.memory_space<vmem>>, vector<16x1xf32>
      tpu.vector_store %arg7[%c0_67, %c0_68], %143 {strides = array<i32>} : memref<16x1xf32, #tpu.memory_space<vmem>>, vector<16x1xf32>,
      %cst_69 = arith.constant 0.000000e+00 : f32
      %145 = vector.broadcast %cst_69 : f32 to vector<16x1xf32>
      %c0_70 = arith.constant 0 : index
      %c0_71 = arith.constant 0 : index
      %146 = vector.load %arg8[%c0_70, %c0_71] : memref<16x1xf32, #tpu.memory_space<vmem>>, vector<16x1xf32>
      tpu.vector_store %arg8[%c0_70, %c0_71], %145 {strides = array<i32>} : memref<16x1xf32, #tpu.memory_space<vmem>>, vector<16x1xf32>,
      %147 = vector.broadcast %cst_1 : f32 to vector<16x1xf32>
      %c0_72 = arith.constant 0 : index
      %c0_73 = arith.constant 0 : index
      %148 = vector.load %arg9[%c0_72, %c0_73] : memref<16x1xf32, #tpu.memory_space<vmem>>, vector<16x1xf32>
      tpu.vector_store %arg9[%c0_72, %c0_73], %147 {strides = array<i32>} : memref<16x1xf32, #tpu.memory_space<vmem>>, vector<16x1xf32>,
      %cst_74 = arith.constant 0.000000e+00 : f32
      %149 = vector.broadcast %cst_74 : f32 to vector<16x1xf32>
      %c0_75 = arith.constant 0 : index
      %c0_76 = arith.constant 0 : index
      %150 = vector.load %arg10[%c0_75, %c0_76] : memref<16x1xf32, #tpu.memory_space<vmem>>, vector<16x1xf32>
      tpu.vector_store %arg10[%c0_75, %c0_76], %149 {strides = array<i32>} : memref<16x1xf32, #tpu.memory_space<vmem>>, vector<16x1xf32>,
    } else {
    }
    %c0 = arith.constant 0 : index
    %c0_3 = arith.constant 0 : index
    %3 = vector.load %arg12[%c0, %c0_3] : memref<16x128xf32, #tpu.memory_space<vmem>>, vector<16x128xf32>
    %c0_4 = arith.constant 0 : index
    %c0_5 = arith.constant 0 : index
    %4 = vector.load %arg13[%c0_4, %c0_5] : memref<16x128xf32, #tpu.memory_space<vmem>>, vector<16x128xf32>
    %c0_6 = arith.constant 0 : index
    %c0_7 = arith.constant 0 : index
    %5 = vector.load %arg4[%c0_6, %c0_7] : memref<16x128xf32, #tpu.memory_space<vmem>>, vector<16x128xf32>
    %6 = arith.mulf %5, %5 : vector<16x128xf32>
    %cst_8 = arith.constant dense<0.000000e+00> : vector<16xf32>
    %7 = vector.multi_reduction <add>, %6, %cst_8 [1] : vector<16x128xf32> to vector<16xf32>
    %8 = vector.shape_cast %7 : vector<16xf32> to vector<16x1xf32>
    %cst_9 = arith.constant 1.000000e-24 : f32
    %9 = vector.broadcast %cst_9 : f32 to vector<16x1xf32>
    %10 = arith.maximumf %8, %9 : vector<16x1xf32>
    %11 = math.rsqrt %10 : vector<16x1xf32>
    %12 = vector.broadcast %11 : vector<16x1xf32> to vector<16x128xf32>
    %13 = arith.mulf %5, %12 : vector<16x128xf32>
    %cst_10 = arith.constant 1.41421354 : f32
    %14 = vector.broadcast %cst_10 : f32 to vector<16x128xf32>
    %15 = arith.mulf %13, %14 : vector<16x128xf32>
    %c0_11 = arith.constant 0 : index
    %c0_12 = arith.constant 0 : index
    %16 = vector.load %arg5[%c0_11, %c0_12] : memref<16x128xf32, #tpu.memory_space<vmem>>, vector<16x128xf32>
    %17 = arith.mulf %16, %16 : vector<16x128xf32>
    %cst_13 = arith.constant dense<0.000000e+00> : vector<16xf32>
    %18 = vector.multi_reduction <add>, %17, %cst_13 [1] : vector<16x128xf32> to vector<16xf32>
    %19 = vector.shape_cast %18 : vector<16xf32> to vector<16x1xf32>
    %cst_14 = arith.constant 1.000000e-24 : f32
    %20 = vector.broadcast %cst_14 : f32 to vector<16x1xf32>
    %21 = arith.maximumf %19, %20 : vector<16x1xf32>
    %22 = math.rsqrt %21 : vector<16x1xf32>
    %23 = vector.broadcast %22 : vector<16x1xf32> to vector<16x128xf32>
    %24 = arith.mulf %16, %23 : vector<16x128xf32>
    %cst_15 = arith.constant 1.41421354 : f32
    %25 = vector.broadcast %cst_15 : f32 to vector<16x128xf32>
    %26 = arith.mulf %24, %25 : vector<16x128xf32>
    %cst_16 = arith.constant dense<0.000000e+00> : vector<16x16xf32>
    %27 = tpu.matmul %3, %15, %cst_16 {dimension_numbers = #tpu.dot_dimension_numbers<[1], [1], [0], [0], [0, 0, 1, 0], [], []>} : vector<16x128xf32>, vector<16x128xf32>, vector<16x16xf32> -> vector<16x16xf32>
    %cst_17 = arith.constant dense<0.000000e+00> : vector<16x16xf32>
    %28 = tpu.matmul %3, %26, %cst_17 {dimension_numbers = #tpu.dot_dimension_numbers<[1], [1], [0], [0], [0, 0, 1, 0], [], []>} : vector<16x128xf32>, vector<16x128xf32>, vector<16x16xf32> -> vector<16x16xf32>
    %cst_18 = arith.constant dense<0.000000e+00> : vector<16x16xf32>
    %29 = tpu.matmul %4, %15, %cst_18 {dimension_numbers = #tpu.dot_dimension_numbers<[1], [1], [0], [0], [0, 0, 1, 0], [], []>} : vector<16x128xf32>, vector<16x128xf32>, vector<16x16xf32> -> vector<16x16xf32>
    %cst_19 = arith.constant dense<0.000000e+00> : vector<16x16xf32>
    %30 = tpu.matmul %4, %26, %cst_19 {dimension_numbers = #tpu.dot_dimension_numbers<[1], [1], [0], [0], [0, 0, 1, 0], [], []>} : vector<16x128xf32>, vector<16x128xf32>, vector<16x16xf32> -> vector<16x16xf32>
    %31 = tpu.iota {dimensions = array<i32: 0>} : vector<16x16xi32>
    %c16_i32 = arith.constant 16 : i32
    %32 = arith.muli %arg0, %c16_i32 : i32
    %33 = vector.broadcast %32 : i32 to vector<16x16xi32>
    %34 = arith.addi %31, %33 : vector<16x16xi32>
    %35 = tpu.iota {dimensions = array<i32: 1>} : vector<16x16xi32>
    %c16_i32_20 = arith.constant 16 : i32
    %36 = arith.muli %arg1, %c16_i32_20 : i32
    %37 = vector.broadcast %36 : i32 to vector<16x16xi32>
    %38 = arith.addi %35, %37 : vector<16x16xi32>
    %39 = arith.cmpi eq, %34, %38 : vector<16x16xi32>
    %cst_21 = arith.constant -1.000000e+30 : f32
    %cst_22 = arith.constant 0.000000e+00 : f32
    %40 = vector.broadcast %cst_21 : f32 to vector<16x16xf32>
    %41 = vector.broadcast %cst_22 : f32 to vector<16x16xf32>
    %42 = arith.select %39, %40, %41 : vector<16x16xi1>, vector<16x16xf32>
    %43 = tpu.iota {dimensions = array<i32: 1>} : vector<1x16xi32>
    %c16_i32_23 = arith.constant 16 : i32
    %44 = arith.muli %arg1, %c16_i32_23 : i32
    %45 = vector.broadcast %44 : i32 to vector<1x16xi32>
    %46 = arith.addi %43, %45 : vector<1x16xi32>
    %c8_i32 = arith.constant 8 : i32
    %47 = vector.broadcast %c8_i32 : i32 to vector<1x16xi32>
    %48 = arith.cmpi sge, %46, %47 : vector<1x16xi32>
    %cst_24 = arith.constant -1.000000e+30 : f32
    %cst_25 = arith.constant 0.000000e+00 : f32
    %49 = vector.broadcast %cst_24 : f32 to vector<1x16xf32>
    %50 = vector.broadcast %cst_25 : f32 to vector<1x16xf32>
    %51 = arith.select %48, %49, %50 : vector<1x16xi1>, vector<1x16xf32>
    %52 = vector.broadcast %51 : vector<1x16xf32> to vector<16x16xf32>
    %53 = arith.addf %42, %52 : vector<16x16xf32>
    %54 = vector.broadcast %51 : vector<1x16xf32> to vector<16x16xf32>
    %55 = arith.addf %28, %54 : vector<16x16xf32>
    %56 = vector.broadcast %51 : vector<1x16xf32> to vector<16x16xf32>
    %57 = arith.addf %29, %56 : vector<16x16xf32>
    %58 = arith.addf %27, %53 : vector<16x16xf32>
    %59 = arith.addf %30, %53 : vector<16x16xf32>
    %c0_26 = arith.constant 0 : index
    %c0_27 = arith.constant 0 : index
    %60 = vector.load %arg7[%c0_26, %c0_27] : memref<16x1xf32, #tpu.memory_space<vmem>>, vector<16x1xf32>
    %cst_28 = arith.constant dense<0xFF800000> : vector<16xf32>
    %61 = vector.multi_reduction <maximumf>, %58, %cst_28 [1] : vector<16x16xf32> to vector<16xf32>
    %62 = vector.shape_cast %61 : vector<16xf32> to vector<16x1xf32>
    %cst_29 = arith.constant dense<0xFF800000> : vector<16xf32>
    %63 = vector.multi_reduction <maximumf>, %55, %cst_29 [1] : vector<16x16xf32> to vector<16xf32>
    %64 = vector.shape_cast %63 : vector<16xf32> to vector<16x1xf32>
    %65 = arith.maximumf %62, %64 : vector<16x1xf32>
    %66 = arith.maximumf %60, %65 : vector<16x1xf32>
    %67 = vector.broadcast %66 : vector<16x1xf32> to vector<16x16xf32>
    %68 = arith.subf %58, %67 : vector<16x16xf32>
    %69 = math.exp %68 : vector<16x16xf32>
    %cst_30 = arith.constant dense<0.000000e+00> : vector<16xf32>
    %70 = vector.multi_reduction <add>, %69, %cst_30 [1] : vector<16x16xf32> to vector<16xf32>
    %71 = vector.shape_cast %70 : vector<16xf32> to vector<16x1xf32>
    %72 = vector.broadcast %66 : vector<16x1xf32> to vector<16x16xf32>
    %73 = arith.subf %55, %72 : vector<16x16xf32>
    %74 = math.exp %73 : vector<16x16xf32>
    %cst_31 = arith.constant dense<0.000000e+00> : vector<16xf32>
    %75 = vector.multi_reduction <add>, %74, %cst_31 [1] : vector<16x16xf32> to vector<16xf32>
    %76 = vector.shape_cast %75 : vector<16xf32> to vector<16x1xf32>
    %77 = arith.addf %71, %76 : vector<16x1xf32>
    %78 = arith.subf %60, %66 : vector<16x1xf32>
    %79 = math.exp %78 : vector<16x1xf32>
    %c0_32 = arith.constant 0 : index
    %c0_33 = arith.constant 0 : index
    %80 = vector.load %arg8[%c0_32, %c0_33] : memref<16x1xf32, #tpu.memory_space<vmem>>, vector<16x1xf32>
    %81 = arith.mulf %79, %80 : vector<16x1xf32>
    %82 = arith.addf %81, %77 : vector<16x1xf32>
    %c0_34 = arith.constant 0 : index
    %c0_35 = arith.constant 0 : index
    %83 = vector.load %arg8[%c0_34, %c0_35] : memref<16x1xf32, #tpu.memory_space<vmem>>, vector<16x1xf32>
    tpu.vector_store %arg8[%c0_34, %c0_35], %82 {strides = array<i32>} : memref<16x1xf32, #tpu.memory_space<vmem>>, vector<16x1xf32>,
    %c0_36 = arith.constant 0 : index
    %c0_37 = arith.constant 0 : index
    %84 = vector.load %arg7[%c0_36, %c0_37] : memref<16x1xf32, #tpu.memory_space<vmem>>, vector<16x1xf32>
    tpu.vector_store %arg7[%c0_36, %c0_37], %66 {strides = array<i32>} : memref<16x1xf32, #tpu.memory_space<vmem>>, vector<16x1xf32>,
    %c0_38 = arith.constant 0 : index
    %c0_39 = arith.constant 0 : index
    %85 = vector.load %arg9[%c0_38, %c0_39] : memref<16x1xf32, #tpu.memory_space<vmem>>, vector<16x1xf32>
    %cst_40 = arith.constant dense<0xFF800000> : vector<16xf32>
    %86 = vector.multi_reduction <maximumf>, %59, %cst_40 [1] : vector<16x16xf32> to vector<16xf32>
    %87 = vector.shape_cast %86 : vector<16xf32> to vector<16x1xf32>
    %cst_41 = arith.constant dense<0xFF800000> : vector<16xf32>
    %88 = vector.multi_reduction <maximumf>, %57, %cst_41 [1] : vector<16x16xf32> to vector<16xf32>
    %89 = vector.shape_cast %88 : vector<16xf32> to vector<16x1xf32>
    %90 = arith.maximumf %87, %89 : vector<16x1xf32>
    %91 = arith.maximumf %85, %90 : vector<16x1xf32>
    %92 = vector.broadcast %91 : vector<16x1xf32> to vector<16x16xf32>
    %93 = arith.subf %59, %92 : vector<16x16xf32>
    %94 = math.exp %93 : vector<16x16xf32>
    %cst_42 = arith.constant dense<0.000000e+00> : vector<16xf32>
    %95 = vector.multi_reduction <add>, %94, %cst_42 [1] : vector<16x16xf32> to vector<16xf32>
    %96 = vector.shape_cast %95 : vector<16xf32> to vector<16x1xf32>
    %97 = vector.broadcast %91 : vector<16x1xf32> to vector<16x16xf32>
    %98 = arith.subf %57, %97 : vector<16x16xf32>
    %99 = math.exp %98 : vector<16x16xf32>
    %cst_43 = arith.constant dense<0.000000e+00> : vector<16xf32>
    %100 = vector.multi_reduction <add>, %99, %cst_43 [1] : vector<16x16xf32> to vector<16xf32>
    %101 = vector.shape_cast %100 : vector<16xf32> to vector<16x1xf32>
    %102 = arith.addf %96, %101 : vector<16x1xf32>
    %103 = arith.subf %85, %91 : vector<16x1xf32>
    %104 = math.exp %103 : vector<16x1xf32>
    %c0_44 = arith.constant 0 : index
    %c0_45 = arith.constant 0 : index
    %105 = vector.load %arg10[%c0_44, %c0_45] : memref<16x1xf32, #tpu.memory_space<vmem>>, vector<16x1xf32>
    %106 = arith.mulf %104, %105 : vector<16x1xf32>
    %107 = arith.addf %106, %102 : vector<16x1xf32>
    %c0_46 = arith.constant 0 : index
    %c0_47 = arith.constant 0 : index
    %108 = vector.load %arg10[%c0_46, %c0_47] : memref<16x1xf32, #tpu.memory_space<vmem>>, vector<16x1xf32>
    tpu.vector_store %arg10[%c0_46, %c0_47], %107 {strides = array<i32>} : memref<16x1xf32, #tpu.memory_space<vmem>>, vector<16x1xf32>,
    %c0_48 = arith.constant 0 : index
    %c0_49 = arith.constant 0 : index
    %109 = vector.load %arg9[%c0_48, %c0_49] : memref<16x1xf32, #tpu.memory_space<vmem>>, vector<16x1xf32>
    tpu.vector_store %arg9[%c0_48, %c0_49], %91 {strides = array<i32>} : memref<16x1xf32, #tpu.memory_space<vmem>>, vector<16x1xf32>,
    %c0_i32_50 = arith.constant 0 : i32
    %110 = arith.cmpi eq, %arg1, %c0_i32_50 : i32
    %111 = arith.extui %110 : i1 to i32
    %c0_i32_51 = arith.constant 0 : i32
    %112 = arith.cmpi ne, %111, %c0_i32_51 : i32
    scf.if %112 {
      %c0_52 = arith.constant 0 : index
      %c0_53 = arith.constant 0 : index
      %113 = vector.load %arg11[%c0_52, %c0_53] : memref<16x1xf32, #tpu.memory_space<vmem>>, vector<16x1xf32>
      %c0_54 = arith.constant 0 : index
      %c0_55 = arith.constant 0 : index
      %114 = vector.load %arg7[%c0_54, %c0_55] : memref<16x1xf32, #tpu.memory_space<vmem>>, vector<16x1xf32>
      %c0_56 = arith.constant 0 : index
      %c0_57 = arith.constant 0 : index
      %115 = vector.load %arg8[%c0_56, %c0_57] : memref<16x1xf32, #tpu.memory_space<vmem>>, vector<16x1xf32>
      %116 = math.log %115 : vector<16x1xf32>
      %117 = arith.addf %114, %116 : vector<16x1xf32>
      %118 = arith.subf %117, %113 : vector<16x1xf32>
      %c0_58 = arith.constant 0 : index
      %c0_59 = arith.constant 0 : index
      %119 = vector.load %arg9[%c0_58, %c0_59] : memref<16x1xf32, #tpu.memory_space<vmem>>, vector<16x1xf32>
      %c0_60 = arith.constant 0 : index
      %c0_61 = arith.constant 0 : index
      %120 = vector.load %arg10[%c0_60, %c0_61] : memref<16x1xf32, #tpu.memory_space<vmem>>, vector<16x1xf32>
      %121 = math.log %120 : vector<16x1xf32>
      %122 = arith.addf %119, %121 : vector<16x1xf32>
      %123 = arith.subf %122, %113 : vector<16x1xf32>
      %124 = tpu.iota {dimensions = array<i32: 0>} : vector<16x1xi32>
      %c16_i32_62 = arith.constant 16 : i32
      %125 = arith.muli %arg0, %c16_i32_62 : i32
      %126 = vector.broadcast %125 : i32 to vector<16x1xi32>
      %127 = arith.addi %124, %126 : vector<16x1xi32>
      %c8_i32_63 = arith.constant 8 : i32
      %128 = vector.broadcast %c8_i32_63 : i32 to vector<16x1xi32>
      %129 = arith.cmpi slt, %127, %128 : vector<16x1xi32>
      %cst_64 = arith.constant 0.000000e+00 : f32
      %130 = vector.broadcast %cst_64 : f32 to vector<16x1xf32>
      %131 = arith.select %129, %118, %130 : vector<16x1xi1>, vector<16x1xf32>
      %cst_65 = arith.constant 0.000000e+00 : f32
      %132 = vector.broadcast %cst_65 : f32 to vector<16x1xf32>
      %133 = arith.select %129, %123, %132 : vector<16x1xi1>, vector<16x1xf32>
      %c0_66 = arith.constant 0 : index
      %c0_67 = arith.constant 0 : index
      %134 = vector.load %arg6[%c0_66, %c0_67] : memref<16x2xf32, #tpu.memory_space<vmem>>, vector<16x1xf32>
      tpu.vector_store %arg6[%c0_66, %c0_67], %131 {strides = array<i32>} : memref<16x2xf32, #tpu.memory_space<vmem>>, vector<16x1xf32>,
      %c0_68 = arith.constant 0 : index
      %c1 = arith.constant 1 : index
      %135 = vector.load %arg6[%c0_68, %c1] : memref<16x2xf32, #tpu.memory_space<vmem>>, vector<16x1xf32>
      tpu.vector_store %arg6[%c0_68, %c1], %133 {strides = array<i32>} : memref<16x2xf32, #tpu.memory_space<vmem>>, vector<16x1xf32>,
    } else {
    }
    return
  }
  func.func @transform_0(%arg0: i32, %arg1: i32) -> (i32, i32) {
    %c0_i32 = arith.constant 0 : i32
    %c0_i32_0 = arith.constant 0 : i32
    return %arg0, %c0_i32 : i32, i32
  }
  func.func @transform_1(%arg0: i32, %arg1: i32) -> (i32, i32) {
    %c0_i32 = arith.constant 0 : i32
    %c0_i32_0 = arith.constant 0 : i32
    return %arg0, %c0_i32 : i32, i32
  }
  func.func @transform_2(%arg0: i32, %arg1: i32) -> (i32, i32) {
    %c0_i32 = arith.constant 0 : i32
    %c0_i32_0 = arith.constant 0 : i32
    return %arg1, %c0_i32 : i32, i32
  }
  func.func @transform_3(%arg0: i32, %arg1: i32) -> (i32, i32) {
    %c0_i32 = arith.constant 0 : i32
    %c0_i32_0 = arith.constant 0 : i32
    return %arg1, %c0_i32 : i32, i32
  }
  func.func @transform_4(%arg0: i32, %arg1: i32) -> (i32, i32) {
    %c0_i32 = arith.constant 0 : i32
    %c0_i32_0 = arith.constant 0 : i32
    return %arg0, %c0_i32 : i32, i32
  }
}

</mosaic_0001>

<llo_original>
// kernel: tpu_custom_call.1
$region0: #{tpu_custom_call.1}
  #allocation0 [shape = 'u32[]', space=smem, size = 0x4, offset = 0x4, fixed_abs, tag = 'smem constant byte address 0x4 - core index']
  #allocation1 [shape = 'u32[144,128]{1,0:T(1,128)}', space=vmem, size = 0x12000, scoped, tag = 'internal scratch']
  #allocation2 [shape = 'f32[16,1]{1,0:T(8,128)}', space=vmem, size = 0x2000, scoped, tag = 'scratch operand']
  #allocation3 [shape = 'f32[16,1]{1,0:T(8,128)}', space=vmem, size = 0x2000, scoped, tag = 'scratch operand']
  #allocation4 [shape = 'f32[16,1]{1,0:T(8,128)}', space=vmem, size = 0x2000, scoped, tag = 'scratch operand']
  #allocation5 [shape = 'f32[16,1]{1,0:T(8,128)}', space=vmem, size = 0x2000, scoped, tag = 'scratch operand']
  #allocation6 [shape = 'f32[16,1]{1,0:T(8,128)}', space=vmem, size = 0x2000, scoped, tag = 'scratch operand']
  #allocation7 [shape = 'f32[16,128]{1,0:T(8,128)}', space=vmem, size = 0x2000, scoped, tag = 'scratch operand']
  #allocation8 [shape = 'f32[16,128]{1,0:T(8,128)}', space=vmem, size = 0x2000, scoped, tag = 'scratch operand']
  %s0 = inlined_call_operand.hbm [shape: f32[16,128], index: 0, kind: input, shape index: {}]
  %s1 = inlined_call_operand.hbm [shape: f32[16,128], index: 1, kind: input, shape index: {}]
  %s2 = inlined_call_operand.hbm [shape: f32[16,128], index: 2, kind: input, shape index: {}]
  %s3 = inlined_call_operand.hbm [shape: f32[16,128], index: 3, kind: input, shape index: {}]
  %s4 = inlined_call_operand.vmem [shape: f32[16,2], index: 4, kind: output, shape index: {}]
  %s5 = sld [smem:[#allocation0]]
  $region50: #{tpu_custom_call.1} parent=0
    _
  %s7 = ssub.s32 1, %s5
  %s8 = scalar_select 0, %s7, %s5
  $region1: #{tpu_custom_call.1} parent=0
    #allocation9 [shape = 'u8[8192]{0}', space=vmem, size = 0x2000, scoped, tag = 'input window, operand 0, single buffered']
    #allocation10 [shape = 's32[1]{0}', space=sflag, size = 0x4, scoped, tag = 'scoped memory for tpu_custom_call.1']
    #allocation11 [shape = 'u8[8192]{0}', space=vmem, size = 0x2000, scoped, tag = 'input window, operand 1, single buffered']
    #allocation12 [shape = 's32[1]{0}', space=sflag, size = 0x4, scoped, tag = 'scoped memory for tpu_custom_call.1']
    #allocation13 [shape = 'u8[8192]{0}', space=vmem, size = 0x2000, scoped, tag = 'input window, operand 2, single buffered']
    #allocation14 [shape = 'u8[8192]{0}', space=vmem, size = 0x2000, scoped, tag = 'input window, operand 3, single buffered']
    #allocation15 [shape = 's32[1]{0}', space=sflag, size = 0x4, scoped, tag = 'scoped memory for tpu_custom_call.1']
    %9 = vsyncpa [#allocation10], 0
    %10 = vsyncpa [#allocation12], 0
    %11 = vsyncpa [#allocation15], 0
    // Predicated region
    $region2: #{tpu_custom_call.1} parent=1 // pred_check
      _
    $region3: #{tpu_custom_call.1} parent=1 // pred_check_branch
      %13 = sbr.rel (0) target = $region5
    $region4: #{tpu_custom_call.1} parent=1 // pred_region
      %s15 = ssub.s32 256, 256
      %16 = vsyncadd [#allocation10], %s15
      %s17 = sshll.u32 [#allocation9], 4
      %s18 = int_to_ptr.vmem [resolvable:$true] %s17
      %23 = dma.hbm_to_vmem [thread:$0]  %s0, 256, %s18, [#allocation10], 128, 128, 8
    $region5: #{tpu_custom_call.1} parent=1 // pred_fallthru
      _
    // Predicated region
    $region6: #{tpu_custom_call.1} parent=1 // pred_check
      _
    $region7: #{tpu_custom_call.1} parent=1 // pred_check_branch
      %25 = sbr.rel (0) target = $region9
    $region8: #{tpu_custom_call.1} parent=1 // pred_region
      %s27 = ssub.s32 256, 256
      %28 = vsyncadd [#allocation12], %s27
      %s29 = sshll.u32 [#allocation11], 4
      %s30 = int_to_ptr.vmem [resolvable:$true] %s29
      %35 = dma.hbm_to_vmem [thread:$0]  %s1, 256, %s30, [#allocation12], 128, 128, 8
    $region9: #{tpu_custom_call.1} parent=1 // pred_fallthru
      _
    // Predicated region
    $region10: #{tpu_custom_call.1} parent=1 // pred_check
      _
    $region11: #{tpu_custom_call.1} parent=1 // pred_check_branch
      %37 = sbr.rel (0) target = $region13
    $region12: #{tpu_custom_call.1} parent=1 // pred_region
      %s39 = ssub.s32 256, 256
      %40 = vsyncadd [#allocation12], %s39
      %s41 = sshll.u32 [#allocation13], 4
      %s42 = int_to_ptr.vmem [resolvable:$true] %s41
      %47 = dma.hbm_to_vmem [thread:$0]  %s2, 256, %s42, [#allocation12], 128, 128, 8
    $region13: #{tpu_custom_call.1} parent=1 // pred_fallthru
      _
    // Predicated region
    $region14: #{tpu_custom_call.1} parent=1 // pred_check
      _
    $region15: #{tpu_custom_call.1} parent=1 // pred_check_branch
      %49 = sbr.rel (0) target = $region17
    $region16: #{tpu_custom_call.1} parent=1 // pred_region
      %s51 = ssub.s32 256, 256
      %52 = vsyncadd [#allocation15], %s51
      %s53 = sshll.u32 [#allocation14], 4
      %s54 = int_to_ptr.vmem [resolvable:$true] %s53
      %59 = dma.hbm_to_vmem [thread:$0]  %s3, 256, %s54, [#allocation15], 128, 128, 8
    $region17: #{tpu_custom_call.1} parent=1 // pred_fallthru
      _
    // Predicated region
    $region18: #{tpu_custom_call.1} parent=1 // pred_check
      _
    $region19: #{tpu_custom_call.1} parent=1 // pred_check_branch
      %61 = sbr.rel (0) target = $region21
    $region20: #{tpu_custom_call.1} parent=1 // pred_region
      %62 = dma.done [#allocation10], 256
    $region21: #{tpu_custom_call.1} parent=1 // pred_fallthru
      _
    // Predicated region
    $region22: #{tpu_custom_call.1} parent=1 // pred_check
      _
    $region23: #{tpu_custom_call.1} parent=1 // pred_check_branch
      %64 = sbr.rel (0) target = $region25
    $region24: #{tpu_custom_call.1} parent=1 // pred_region
      %65 = dma.done [#allocation12], 256
    $region25: #{tpu_custom_call.1} parent=1 // pred_fallthru
      _
    // Predicated region
    $region26: #{tpu_custom_call.1} parent=1 // pred_check
      _
    $region27: #{tpu_custom_call.1} parent=1 // pred_check_branch
      %67 = sbr.rel (0) target = $region29
    $region28: #{tpu_custom_call.1} parent=1 // pred_region
      %68 = dma.done [#allocation12], 256
    $region29: #{tpu_custom_call.1} parent=1 // pred_fallthru
      _
    // Predicated region
    $region30: #{tpu_custom_call.1} parent=1 // pred_check
      _
    $region31: #{tpu_custom_call.1} parent=1 // pred_check_branch
      %70 = sbr.rel (0) target = $region33
    $region32: #{tpu_custom_call.1} parent=1 // pred_region
      %71 = dma.done [#allocation15], 256
    $region33: #{tpu_custom_call.1} parent=1 // pred_fallthru
      _
    %p72 = scmp.eq.s32.totalorder 0, 0
    // Predicated region
    $region34: #{tpu_custom_call.1} parent=1 // pred_check
      %p73 = pneg %p72
    $region35: #{tpu_custom_call.1} parent=1 // pred_check_branch
      %75 = sbr.rel (%p73) target = $region37
    $region36: #{tpu_custom_call.1} parent=1 // pred_region
      %v76 = vld [vmem:[#allocation9] sm:$0xff]
      %v77 = vld [vmem:[#allocation9 + $0x8] sm:$0xff]
      %v78 = vmul.f32 %v76, %v76
      %v79 = vmul.f32 %v77, %v77
      %80 = vadd.xlane.f32.xlu0 %v78
      %v81 = vpop.xlane.xlu0 %80
      %82 = vadd.xlane.f32.xlu0 %v79
      %v83 = vpop.xlane.xlu0 %82
      %v84 = vmax.f32 %v81, 1e-24
      %v85 = vmax.f32 %v83, 1e-24
      %v86 = vrsqrt.pop %v84
      %v87 = vrsqrt.pop %v85
      %v88 = vmul.f32 %v76, %v86
      %v89 = vmul.f32 %v77, %v87
      %v90 = vld [vmem:[#allocation11] sm:$0xff]
      %v91 = vld [vmem:[#allocation11 + $0x8] sm:$0xff]
      %v92 = vmul.f32 %v90, %v90
      %v93 = vmul.f32 %v91, %v91
      %94 = vadd.xlane.f32.xlu0 %v92
      %v95 = vpop.xlane.xlu0 %94
      %96 = vadd.xlane.f32.xlu0 %v93
      %v97 = vpop.xlane.xlu0 %96
      %v98 = vmax.f32 %v95, 1e-24
      %v99 = vmax.f32 %v97, 1e-24
      %v100 = vrsqrt.pop %v98
      %v101 = vrsqrt.pop %v99
      %v102 = vmul.f32 %v90, %v100
      %v103 = vmul.f32 %v91, %v101
      %v104 = vmul.f32 %v88, 1.4142135
      %v105 = vmul.f32 %v89, 1.4142135
      %106 = vst [vmem:[#allocation7] sm:$0xff] %v104
      %107 = vst [vmem:[#allocation7 + $0x8] sm:$0xff] %v105
      %v108 = vmul.f32 %v102, 1.4142135
      %v109 = vmul.f32 %v103, 1.4142135
      %110 = vst [vmem:[#allocation8] sm:$0xff] %v108
      %111 = vst [vmem:[#allocation8 + $0x8] sm:$0xff] %v109
      %v112 = vmul.f32 %v88, %v102
      %v113 = vmul.f32 %v89, %v103
      %114 = vadd.xlane.f32.xlu0 %v112
      %v115 = vpop.xlane.xlu0 %114
      %116 = vadd.xlane.f32.xlu0 %v113
      %v117 = vpop.xlane.xlu0 %116
      %v118 = vmul.f32 %v115, 2.0
      %v119 = vmul.f32 %v117, 2.0
      %vm120 = vcmask 7168
      %121 = vst.msk [vmem:[#allocation6] sm:$0xff] %vm120, %v118
      %122 = vst.msk [vmem:[#allocation6 + $0x8] sm:$0xff] %vm120, %v119
      %123 = vst.msk [vmem:[#allocation2] sm:$0xff] %vm120, -1e+30
      %124 = vst.msk [vmem:[#allocation2 + $0x8] sm:$0xff] %vm120, -1e+30
      %125 = vst.msk [vmem:[#allocation3] sm:$0xff] %vm120, 0.0
      %126 = vst.msk [vmem:[#allocation3 + $0x8] sm:$0xff] %vm120, 0.0
      %127 = vst.msk [vmem:[#allocation4] sm:$0xff] %vm120, -1e+30
      %128 = vst.msk [vmem:[#allocation4 + $0x8] sm:$0xff] %vm120, -1e+30
      %129 = vst.msk [vmem:[#allocation5] sm:$0xff] %vm120, 0.0
      %130 = vst.msk [vmem:[#allocation5 + $0x8] sm:$0xff] %vm120, 0.0
    $region37: #{tpu_custom_call.1} parent=1 // pred_fallthru
      _
    %v131 = vld [vmem:[#allocation7] sm:$0xff]
    %v132 = vld [vmem:[#allocation7 + $0x8] sm:$0xff]
    %v133 = vld [vmem:[#allocation8] sm:$0xff]
    %v134 = vld [vmem:[#allocation8 + $0x8] sm:$0xff]
    %v135 = vld [vmem:[#allocation13] sm:$0xff]
    %v136 = vld [vmem:[#allocation13 + $0x8] sm:$0xff]
    %v137 = vmul.f32 %v135, %v135
    %v138 = vmul.f32 %v136, %v136
    %139 = vadd.xlane.f32.xlu0 %v137
    %v140 = vpop.xlane.xlu0 %139
    %141 = vadd.xlane.f32.xlu0 %v138
    %v142 = vpop.xlane.xlu0 %141
    %v143 = vmax.f32 %v140, 1e-24
    %v144 = vmax.f32 %v142, 1e-24
    %v145 = vrsqrt.pop %v143
    %v146 = vrsqrt.pop %v144
    %v147 = vmul.f32 %v135, %v145
    %v148 = vmul.f32 %v136, %v146
    %v149 = vmul.f32 %v147, 1.4142135
    %v150 = vmul.f32 %v148, 1.4142135
    %v151 = vld [vmem:[#allocation14] sm:$0xff]
    %v152 = vld [vmem:[#allocation14 + $0x8] sm:$0xff]
    %v153 = vmul.f32 %v151, %v151
    %v154 = vmul.f32 %v152, %v152
    %155 = vadd.xlane.f32.xlu0 %v153
    %v156 = vpop.xlane.xlu0 %155
    %157 = vadd.xlane.f32.xlu0 %v154
    %v158 = vpop.xlane.xlu0 %157
    %v159 = vmax.f32 %v156, 1e-24
    %v160 = vmax.f32 %v158, 1e-24
    %v161 = vrsqrt.pop %v159
    %v162 = vrsqrt.pop %v160
    %v163 = vmul.f32 %v151, %v161
    %v164 = vmul.f32 %v152, %v162
    %v165 = vmul.f32 %v163, 1.4142135
    %v166 = vmul.f32 %v164, 1.4142135
    %v167 = vlaneseq
    %v168 = vshrl.u32 %v167, 7
    %v169 = vadd.s32 %v168, 8
    %s170 = smul.u32 0, 16
    %v171 = vstv %s170
    %v172 = vadd.s32 %v168, %v171
    %v173 = vadd.s32 %v169, %v171
    %v174 = vlaneseq
    %v175 = vand.u32 %v174, 127
    %s176 = smul.u32 0, 16
    %v177 = vstv %s176
    %v178 = vadd.s32 %v175, %v177
    %vm179 = vcmp.eq.s32.totalorder %v172, %v178
    %vm180 = vcmp.eq.s32.totalorder %v173, %v178
    %v181 = vsel %vm179, -1e+30, 0.0
    %v182 = vsel %vm180, -1e+30, 0.0
    %vm183 = vcmp.ge.s32.totalorder %v178, 8
    %v184 = vsel %vm183, -1e+30, 0.0
    %v185 = vadd.f32 %v181, %v184
    %v186 = vadd.f32 %v182, %v184
    %187 = vmatprep.subr.mxu0 0.0
    %188 = vmatpush1.xpose.msra.mxu0 %v165
    %189 = vmatprep.subr.mxu0 0.0
    %190 = vmatpush1.xpose.msra.mxu0 %v166
    %191 = vmatprep.subr.mxu0 0.0
    %192 = vmatpush1.xpose.msra.mxu0 0.0
    %193 = vmatprep.subr.mxu0 0.0
    %194 = vmatpush1.xpose.msra.mxu0 0.0
    %195 = vmatprep.subr.mxu0 0.0
    %196 = vmatpush1.xpose.msra.mxu0 0.0
    %197 = vmatprep.subr.mxu0 0.0
    %198 = vmatpush1.xpose.msra.mxu0 0.0
    %199 = vmatprep.subr.mxu0 0.0
    %200 = vmatpush1.xpose.msra.mxu0 0.0
    %201 = vmatprep.subr.mxu0 0.0
    %202 = vmatpush1.xpose.msra.mxu0 0.0
    %203 = vmatprep.subr.mxu0 0.0
    %204 = vmatpush1.xpose.msra.mxu0 0.0
    %205 = vmatprep.subr.mxu0 0.0
    %206 = vmatpush1.xpose.msra.mxu0 0.0
    %207 = vmatprep.subr.mxu0 0.0
    %208 = vmatpush1.xpose.msra.mxu0 0.0
    %209 = vmatprep.subr.mxu0 0.0
    %210 = vmatpush1.xpose.msra.mxu0 0.0
    %211 = vmatprep.subr.mxu0 0.0
    %212 = vmatpush1.xpose.msra.mxu0 0.0
    %213 = vmatprep.subr.mxu0 0.0
    %214 = vmatpush1.xpose.msra.mxu0 0.0
    %215 = vmatprep.subr.mxu0 0.0
    %216 = vmatpush1.xpose.msra.mxu0 0.0
    %217 = vmatprep.subr.mxu0 0.0
    %218 = vmatpush1.xpose.msra.mxu0 0.0
    %219 = vmatprep.subr.mxu0 0.0
    %220 = vmatpush1.xpose.msra.mxu0 0.0
    %221 = vmatprep.subr.mxu0 0.0
    %222 = vmatpush1.xpose.msra.mxu0 0.0
    %223 = vmatprep.subr.mxu0 0.0
    %224 = vmatpush1.xpose.msra.mxu0 0.0
    %225 = vmatprep.subr.mxu0 0.0
    %226 = vmatpush1.xpose.msra.mxu0 0.0
    %227 = vmatprep.subr.mxu0 0.0
    %228 = vmatpush1.xpose.msra.mxu0 0.0
    %229 = vmatprep.subr.mxu0 0.0
    %230 = vmatpush1.xpose.msra.mxu0 0.0
    %231 = vmatprep.subr.mxu0 0.0
    %232 = vmatpush1.xpose.msra.mxu0 0.0
    %233 = vmatprep.subr.mxu0 0.0
    %234 = vmatpush1.xpose.msra.mxu0 0.0
    %235 = vmatprep.subr.mxu0 0.0
    %236 = vmatpush1.xpose.msra.mxu0 0.0
    %237 = vmatprep.subr.mxu0 0.0
    %238 = vmatpush1.xpose.msra.mxu0 0.0
    %239 = vmatprep.subr.mxu0 0.0
    %240 = vmatpush1.xpose.msra.mxu0 0.0
    %241 = vmatprep.subr.mxu0 0.0
    %242 = vmatpush1.xpose.msra.mxu0 0.0
    %243 = vmatprep.subr.mxu0 0.0
    %244 = vmatpush1.xpose.msra.mxu0 0.0
    %245 = vmatprep.subr.mxu0 0.0
    %246 = vmatpush1.xpose.msra.mxu0 0.0
    %247 = vmatprep.subr.mxu0 0.0
    %248 = vmatpush1.xpose.msra.mxu0 0.0
    %249 = vmatprep.subr.mxu0 0.0
    %250 = vmatpush1.xpose.msra.mxu0 0.0
    %251 = vmatprep.mubr.f32.mxu0 0.0
    %252 = vmatmul.mubr.f32.gmra.mrb[0].mxu0 %v131
    %v253 = vpop.f32.mrb[0].mxu0
    %v254 = vadd.f32 %v184, %v253
    %v255 = vpop.f32.mrb[0].mxu0
    %256 = vmatprep.mubr.f32.mxu0 0.0
    %257 = vmatmul.mubr.f32.gmra.mrb[0].mxu0 %v132
    %v258 = vpop.f32.mrb[0].mxu0
    %v259 = vadd.f32 %v184, %v258
    %v260 = vpop.f32.mrb[0].mxu0
    %261 = vdwg.mxu0
    %262 = vmatprep.subr.mxu0 0.0
    %263 = vmatpush1.xpose.msra.mxu0 %v149
    %264 = vmatprep.subr.mxu0 0.0
    %265 = vmatpush1.xpose.msra.mxu0 %v150
    %266 = vmatprep.subr.mxu0 0.0
    %267 = vmatpush1.xpose.msra.mxu0 0.0
    %268 = vmatprep.subr.mxu0 0.0
    %269 = vmatpush1.xpose.msra.mxu0 0.0
    %270 = vmatprep.subr.mxu0 0.0
    %271 = vmatpush1.xpose.msra.mxu0 0.0
    %272 = vmatprep.subr.mxu0 0.0
    %273 = vmatpush1.xpose.msra.mxu0 0.0
    %274 = vmatprep.subr.mxu0 0.0
    %275 = vmatpush1.xpose.msra.mxu0 0.0
    %276 = vmatprep.subr.mxu0 0.0
    %277 = vmatpush1.xpose.msra.mxu0 0.0
    %278 = vmatprep.subr.mxu0 0.0
    %279 = vmatpush1.xpose.msra.mxu0 0.0
    %280 = vmatprep.subr.mxu0 0.0
    %281 = vmatpush1.xpose.msra.mxu0 0.0
    %282 = vmatprep.subr.mxu0 0.0
    %283 = vmatpush1.xpose.msra.mxu0 0.0
    %284 = vmatprep.subr.mxu0 0.0
    %285 = vmatpush1.xpose.msra.mxu0 0.0
    %286 = vmatprep.subr.mxu0 0.0
    %287 = vmatpush1.xpose.msra.mxu0 0.0
    %288 = vmatprep.subr.mxu0 0.0
    %289 = vmatpush1.xpose.msra.mxu0 0.0
    %290 = vmatprep.subr.mxu0 0.0
    %291 = vmatpush1.xpose.msra.mxu0 0.0
    %292 = vmatprep.subr.mxu0 0.0
    %293 = vmatpush1.xpose.msra.mxu0 0.0
    %294 = vmatprep.subr.mxu0 0.0
    %295 = vmatpush1.xpose.msra.mxu0 0.0
    %296 = vmatprep.subr.mxu0 0.0
    %297 = vmatpush1.xpose.msra.mxu0 0.0
    %298 = vmatprep.subr.mxu0 0.0
    %299 = vmatpush1.xpose.msra.mxu0 0.0
    %300 = vmatprep.subr.mxu0 0.0
    %301 = vmatpush1.xpose.msra.mxu0 0.0
    %302 = vmatprep.subr.mxu0 0.0
    %303 = vmatpush1.xpose.msra.mxu0 0.0
    %304 = vmatprep.subr.mxu0 0.0
    %305 = vmatpush1.xpose.msra.mxu0 0.0
    %306 = vmatprep.subr.mxu0 0.0
    %307 = vmatpush1.xpose.msra.mxu0 0.0
    %308 = vmatprep.subr.mxu0 0.0
    %309 = vmatpush1.xpose.msra.mxu0 0.0
    %310 = vmatprep.subr.mxu0 0.0
    %311 = vmatpush1.xpose.msra.mxu0 0.0
    %312 = vmatprep.subr.mxu0 0.0
    %313 = vmatpush1.xpose.msra.mxu0 0.0
    %314 = vmatprep.subr.mxu0 0.0
    %315 = vmatpush1.xpose.msra.mxu0 0.0
    %316 = vmatprep.subr.mxu0 0.0
    %317 = vmatpush1.xpose.msra.mxu0 0.0
    %318 = vmatprep.subr.mxu0 0.0
    %319 = vmatpush1.xpose.msra.mxu0 0.0
    %320 = vmatprep.subr.mxu0 0.0
    %321 = vmatpush1.xpose.msra.mxu0 0.0
    %322 = vmatprep.subr.mxu0 0.0
    %323 = vmatpush1.xpose.msra.mxu0 0.0
    %324 = vmatprep.subr.mxu0 0.0
    %325 = vmatpush1.xpose.msra.mxu0 0.0
    %326 = vmatprep.mubr.f32.mxu0 0.0
    %327 = vmatmul.mubr.f32.gmra.mrb[0].mxu0 %v133
    %v328 = vpop.f32.mrb[0].mxu0
    %v329 = vadd.f32 %v184, %v328
    %v330 = vpop.f32.mrb[0].mxu0
    %331 = vmatprep.mubr.f32.mxu0 0.0
    %332 = vmatmul.mubr.f32.gmra.mrb[0].mxu0 %v134
    %v333 = vpop.f32.mrb[0].mxu0
    %v334 = vadd.f32 %v184, %v333
    %v335 = vpop.f32.mrb[0].mxu0
    %336 = vdwg.mxu0
    %337 = vmatprep.subr.mxu0 0.0
    %338 = vmatpush1.xpose.msra.mxu0 %v149
    %339 = vmatprep.subr.mxu0 0.0
    %340 = vmatpush1.xpose.msra.mxu0 %v150
    %341 = vmatprep.subr.mxu0 0.0
    %342 = vmatpush1.xpose.msra.mxu0 0.0
    %343 = vmatprep.subr.mxu0 0.0
    %344 = vmatpush1.xpose.msra.mxu0 0.0
    %345 = vmatprep.subr.mxu0 0.0
    %346 = vmatpush1.xpose.msra.mxu0 0.0
    %347 = vmatprep.subr.mxu0 0.0
    %348 = vmatpush1.xpose.msra.mxu0 0.0
    %349 = vmatprep.subr.mxu0 0.0
    %350 = vmatpush1.xpose.msra.mxu0 0.0
    %351 = vmatprep.subr.mxu0 0.0
    %352 = vmatpush1.xpose.msra.mxu0 0.0
    %353 = vmatprep.subr.mxu0 0.0
    %354 = vmatpush1.xpose.msra.mxu0 0.0
    %355 = vmatprep.subr.mxu0 0.0
    %356 = vmatpush1.xpose.msra.mxu0 0.0
    %357 = vmatprep.subr.mxu0 0.0
    %358 = vmatpush1.xpose.msra.mxu0 0.0
    %359 = vmatprep.subr.mxu0 0.0
    %360 = vmatpush1.xpose.msra.mxu0 0.0
    %361 = vmatprep.subr.mxu0 0.0
    %362 = vmatpush1.xpose.msra.mxu0 0.0
    %363 = vmatprep.subr.mxu0 0.0
    %364 = vmatpush1.xpose.msra.mxu0 0.0
    %365 = vmatprep.subr.mxu0 0.0
    %366 = vmatpush1.xpose.msra.mxu0 0.0
    %367 = vmatprep.subr.mxu0 0.0
    %368 = vmatpush1.xpose.msra.mxu0 0.0
    %369 = vmatprep.subr.mxu0 0.0
    %370 = vmatpush1.xpose.msra.mxu0 0.0
    %371 = vmatprep.subr.mxu0 0.0
    %372 = vmatpush1.xpose.msra.mxu0 0.0
    %373 = vmatprep.subr.mxu0 0.0
    %374 = vmatpush1.xpose.msra.mxu0 0.0
    %375 = vmatprep.subr.mxu0 0.0
    %376 = vmatpush1.xpose.msra.mxu0 0.0
    %377 = vmatprep.subr.mxu0 0.0
    %378 = vmatpush1.xpose.msra.mxu0 0.0
    %379 = vmatprep.subr.mxu0 0.0
    %380 = vmatpush1.xpose.msra.mxu0 0.0
    %381 = vmatprep.subr.mxu0 0.0
    %382 = vmatpush1.xpose.msra.mxu0 0.0
    %383 = vmatprep.subr.mxu0 0.0
    %384 = vmatpush1.xpose.msra.mxu0 0.0
    %385 = vmatprep.subr.mxu0 0.0
    %386 = vmatpush1.xpose.msra.mxu0 0.0
    %387 = vmatprep.subr.mxu0 0.0
    %388 = vmatpush1.xpose.msra.mxu0 0.0
    %389 = vmatprep.subr.mxu0 0.0
    %390 = vmatpush1.xpose.msra.mxu0 0.0
    %391 = vmatprep.subr.mxu0 0.0
    %392 = vmatpush1.xpose.msra.mxu0 0.0
    %393 = vmatprep.subr.mxu0 0.0
    %394 = vmatpush1.xpose.msra.mxu0 0.0
    %395 = vmatprep.subr.mxu0 0.0
    %396 = vmatpush1.xpose.msra.mxu0 0.0
    %397 = vmatprep.subr.mxu0 0.0
    %398 = vmatpush1.xpose.msra.mxu0 0.0
    %399 = vmatprep.subr.mxu0 0.0
    %400 = vmatpush1.xpose.msra.mxu0 0.0
    %401 = vmatprep.mubr.f32.mxu0 0.0
    %402 = vmatmul.mubr.f32.gmra.mrb[0].mxu0 %v131
    %v403 = vpop.f32.mrb[0].mxu0
    %v404 = vadd.f32 %v185, %v403
    %v405 = vpop.f32.mrb[0].mxu0
    %406 = vmatprep.mubr.f32.mxu0 0.0
    %407 = vmatmul.mubr.f32.gmra.mrb[0].mxu0 %v132
    %v408 = vpop.f32.mrb[0].mxu0
    %v409 = vadd.f32 %v186, %v408
    %v410 = vpop.f32.mrb[0].mxu0
    %411 = vdwg.mxu0
    %412 = vmatprep.subr.mxu0 0.0
    %413 = vmatpush1.xpose.msra.mxu0 %v165
    %414 = vmatprep.subr.mxu0 0.0
    %415 = vmatpush1.xpose.msra.mxu0 %v166
    %416 = vmatprep.subr.mxu0 0.0
    %417 = vmatpush1.xpose.msra.mxu0 0.0
    %418 = vmatprep.subr.mxu0 0.0
    %419 = vmatpush1.xpose.msra.mxu0 0.0
    %420 = vmatprep.subr.mxu0 0.0
    %421 = vmatpush1.xpose.msra.mxu0 0.0
    %422 = vmatprep.subr.mxu0 0.0
    %423 = vmatpush1.xpose.msra.mxu0 0.0
    %424 = vmatprep.subr.mxu0 0.0
    %425 = vmatpush1.xpose.msra.mxu0 0.0
    %426 = vmatprep.subr.mxu0 0.0
    %427 = vmatpush1.xpose.msra.mxu0 0.0
    %428 = vmatprep.subr.mxu0 0.0
    %429 = vmatpush1.xpose.msra.mxu0 0.0
    %430 = vmatprep.subr.mxu0 0.0
    %431 = vmatpush1.xpose.msra.mxu0 0.0
    %432 = vmatprep.subr.mxu0 0.0
    %433 = vmatpush1.xpose.msra.mxu0 0.0
    %434 = vmatprep.subr.mxu0 0.0
    %435 = vmatpush1.xpose.msra.mxu0 0.0
    %436 = vmatprep.subr.mxu0 0.0
    %437 = vmatpush1.xpose.msra.mxu0 0.0
    %438 = vmatprep.subr.mxu0 0.0
    %439 = vmatpush1.xpose.msra.mxu0 0.0
    %440 = vmatprep.subr.mxu0 0.0
    %441 = vmatpush1.xpose.msra.mxu0 0.0
    %442 = vmatprep.subr.mxu0 0.0
    %443 = vmatpush1.xpose.msra.mxu0 0.0
    %444 = vmatprep.subr.mxu0 0.0
    %445 = vmatpush1.xpose.msra.mxu0 0.0
    %446 = vmatprep.subr.mxu0 0.0
    %447 = vmatpush1.xpose.msra.mxu0 0.0
    %448 = vmatprep.subr.mxu0 0.0
    %449 = vmatpush1.xpose.msra.mxu0 0.0
    %450 = vmatprep.subr.mxu0 0.0
    %451 = vmatpush1.xpose.msra.mxu0 0.0
    %452 = vmatprep.subr.mxu0 0.0
    %453 = vmatpush1.xpose.msra.mxu0 0.0
    %454 = vmatprep.subr.mxu0 0.0
    %455 = vmatpush1.xpose.msra.mxu0 0.0
    %456 = vmatprep.subr.mxu0 0.0
    %457 = vmatpush1.xpose.msra.mxu0 0.0
    %458 = vmatprep.subr.mxu0 0.0
    %459 = vmatpush1.xpose.msra.mxu0 0.0
    %460 = vmatprep.subr.mxu0 0.0
    %461 = vmatpush1.xpose.msra.mxu0 0.0
    %462 = vmatprep.subr.mxu0 0.0
    %463 = vmatpush1.xpose.msra.mxu0 0.0
    %464 = vmatprep.subr.mxu0 0.0
    %465 = vmatpush1.xpose.msra.mxu0 0.0
    %466 = vmatprep.subr.mxu0 0.0
    %467 = vmatpush1.xpose.msra.mxu0 0.0
    %468 = vmatprep.subr.mxu0 0.0
    %469 = vmatpush1.xpose.msra.mxu0 0.0
    %470 = vmatprep.subr.mxu0 0.0
    %471 = vmatpush1.xpose.msra.mxu0 0.0
    %472 = vmatprep.subr.mxu0 0.0
    %473 = vmatpush1.xpose.msra.mxu0 0.0
    %474 = vmatprep.subr.mxu0 0.0
    %475 = vmatpush1.xpose.msra.mxu0 0.0
    %476 = vmatprep.mubr.f32.mxu0 0.0
    %477 = vmatmul.mubr.f32.gmra.mrb[0].mxu0 %v133
    %v478 = vpop.f32.mrb[0].mxu0
    %v479 = vadd.f32 %v185, %v478
    %v480 = vpop.f32.mrb[0].mxu0
    %481 = vmatprep.mubr.f32.mxu0 0.0
    %482 = vmatmul.mubr.f32.gmra.mrb[0].mxu0 %v134
    %v483 = vpop.f32.mrb[0].mxu0
    %v484 = vadd.f32 %v186, %v483
    %v485 = vpop.f32.mrb[0].mxu0
    %486 = vdwg.mxu0
    %v487 = vld [vmem:[#allocation2] sm:$0xff]
    %v488 = vld [vmem:[#allocation2 + $0x8] sm:$0xff]
    %vm489 = vcmask 130048
    %v490 = vsel %vm489, %v404, -inf
    %491 = vmax.xlane.f32.xlu0 %v490
    %v492 = vpop.xlane.xlu0 %491
    %v493 = vsel %vm489, %v409, -inf
    %494 = vmax.xlane.f32.xlu0 %v493
    %v495 = vpop.xlane.xlu0 %494
    %v496 = vsel %vm489, %v254, -inf
    %497 = vmax.xlane.f32.xlu0 %v496
    %v498 = vpop.xlane.xlu0 %497
    %v499 = vsel %vm489, %v259, -inf
    %500 = vmax.xlane.f32.xlu0 %v499
    %v501 = vpop.xlane.xlu0 %500
    %v502 = vmax.f32 %v492, %v498
    %v503 = vmax.f32 %v495, %v501
    %v504 = vmax.f32 %v487, %v502
    %v505 = vmax.f32 %v488, %v503
    %507 = vset.pattern.permute.xlu0 0
    %508 = vperm.xlu0 %507, %v504
    %v509 = vpop.permute.xlu0 %508
    %512 = vset.pattern.permute.xlu0 0
    %513 = vperm.xlu0 %512, %v505
    %v514 = vpop.permute.xlu0 %513
    %v516 = vsub.f32 %v404, %v509
    %v517 = vsub.f32 %v409, %v514
    %v518 = vmul.f32 %v516, 1.442695
    %v519 = vpow.pop %v518
    %v520 = vmul.f32 %v517, 1.442695
    %v521 = vpow.pop %v520
    %v522 = vsel %vm489, %v519, 0.0
    %523 = vadd.xlane.f32.xlu0 %v522
    %v524 = vpop.xlane.xlu0 %523
    %v525 = vsel %vm489, %v521, 0.0
    %526 = vadd.xlane.f32.xlu0 %v525
    %v527 = vpop.xlane.xlu0 %526
    %v528 = vsub.f32 %v254, %v509
    %v529 = vsub.f32 %v259, %v514
    %v530 = vmul.f32 %v528, 1.442695
    %v531 = vpow.pop %v530
    %v532 = vmul.f32 %v529, 1.442695
    %v533 = vpow.pop %v532
    %v534 = vsel %vm489, %v531, 0.0
    %535 = vadd.xlane.f32.xlu0 %v534
    %v536 = vpop.xlane.xlu0 %535
    %v537 = vsel %vm489, %v533, 0.0
    %538 = vadd.xlane.f32.xlu0 %v537
    %v539 = vpop.xlane.xlu0 %538
    %v540 = vadd.f32 %v524, %v536
    %v541 = vadd.f32 %v527, %v539
    %v542 = vsub.f32 %v487, %v504
    %v543 = vsub.f32 %v488, %v505
    %v544 = vmul.f32 %v542, 1.442695
    %v545 = vpow.pop %v544
    %v546 = vmul.f32 %v543, 1.442695
    %v547 = vpow.pop %v546
    %v548 = vld [vmem:[#allocation3] sm:$0xff]
    %v549 = vld [vmem:[#allocation3 + $0x8] sm:$0xff]
    %v550 = vmul.f32 %v545, %v548
    %v551 = vmul.f32 %v547, %v549
    %v552 = vadd.f32 %v550, %v540
    %v553 = vadd.f32 %v551, %v541
    %vm554 = vcmask 7168
    %555 = vst.msk [vmem:[#allocation3] sm:$0xff] %vm554, %v552
    %556 = vst.msk [vmem:[#allocation3 + $0x8] sm:$0xff] %vm554, %v553
    %557 = vst.msk [vmem:[#allocation2] sm:$0xff] %vm554, %v504
    %558 = vst.msk [vmem:[#allocation2 + $0x8] sm:$0xff] %vm554, %v505
    %v559 = vld [vmem:[#allocation4] sm:$0xff]
    %v560 = vld [vmem:[#allocation4 + $0x8] sm:$0xff]
    %v561 = vsel %vm489, %v479, -inf
    %562 = vmax.xlane.f32.xlu0 %v561
    %v563 = vpop.xlane.xlu0 %562
    %v564 = vsel %vm489, %v484, -inf
    %565 = vmax.xlane.f32.xlu0 %v564
    %v566 = vpop.xlane.xlu0 %565
    %v567 = vsel %vm489, %v329, -inf
    %568 = vmax.xlane.f32.xlu0 %v567
    %v569 = vpop.xlane.xlu0 %568
    %v570 = vsel %vm489, %v334, -inf
    %571 = vmax.xlane.f32.xlu0 %v570
    %v572 = vpop.xlane.xlu0 %571
    %v573 = vmax.f32 %v563, %v569
    %v574 = vmax.f32 %v566, %v572
    %v575 = vmax.f32 %v559, %v573
    %v576 = vmax.f32 %v560, %v574
    %578 = vset.pattern.permute.xlu0 0
    %579 = vperm.xlu0 %578, %v575
    %v580 = vpop.permute.xlu0 %579
    %583 = vset.pattern.permute.xlu0 0
    %584 = vperm.xlu0 %583, %v576
    %v585 = vpop.permute.xlu0 %584
    %v587 = vsub.f32 %v479, %v580
    %v588 = vsub.f32 %v484, %v585
    %v589 = vmul.f32 %v587, 1.442695
    %v590 = vpow.pop %v589
    %v591 = vmul.f32 %v588, 1.442695
    %v592 = vpow.pop %v591
    %v593 = vsel %vm489, %v590, 0.0
    %594 = vadd.xlane.f32.xlu0 %v593
    %v595 = vpop.xlane.xlu0 %594
    %v596 = vsel %vm489, %v592, 0.0
    %597 = vadd.xlane.f32.xlu0 %v596
    %v598 = vpop.xlane.xlu0 %597
    %v599 = vsub.f32 %v329, %v580
    %v600 = vsub.f32 %v334, %v585
    %v601 = vmul.f32 %v599, 1.442695
    %v602 = vpow.pop %v601
    %v603 = vmul.f32 %v600, 1.442695
    %v604 = vpow.pop %v603
    %v605 = vsel %vm489, %v602, 0.0
    %606 = vadd.xlane.f32.xlu0 %v605
    %v607 = vpop.xlane.xlu0 %606
    %v608 = vsel %vm489, %v604, 0.0
    %609 = vadd.xlane.f32.xlu0 %v608
    %v610 = vpop.xlane.xlu0 %609
    %v611 = vadd.f32 %v595, %v607
    %v612 = vadd.f32 %v598, %v610
    %v613 = vsub.f32 %v559, %v575
    %v614 = vsub.f32 %v560, %v576
    %v615 = vmul.f32 %v613, 1.442695
    %v616 = vpow.pop %v615
    %v617 = vmul.f32 %v614, 1.442695
    %v618 = vpow.pop %v617
    %v619 = vld [vmem:[#allocation5] sm:$0xff]
    %v620 = vld [vmem:[#allocation5 + $0x8] sm:$0xff]
    %v621 = vmul.f32 %v616, %v619
    %v622 = vmul.f32 %v618, %v620
    %v623 = vadd.f32 %v621, %v611
    %v624 = vadd.f32 %v622, %v612
    %625 = vst.msk [vmem:[#allocation5] sm:$0xff] %vm554, %v623
    %626 = vst.msk [vmem:[#allocation5 + $0x8] sm:$0xff] %vm554, %v624
    %627 = vst.msk [vmem:[#allocation4] sm:$0xff] %vm554, %v575
    %628 = vst.msk [vmem:[#allocation4 + $0x8] sm:$0xff] %vm554, %v576
    // Predicated region
    $region38: #{tpu_custom_call.1} parent=1 // pred_check
      %p629 = pneg %p72
    $region39: #{tpu_custom_call.1} parent=1 // pred_check_branch
      %631 = sbr.rel (%p629) target = $region41
    $region40: #{tpu_custom_call.1} parent=1 // pred_region
      %v632 = vld [vmem:[#allocation6] sm:$0xff]
      %v633 = vld [vmem:[#allocation6 + $0x8] sm:$0xff]
      %v634 = vld [vmem:[#allocation2] sm:$0xff]
      %v635 = vld [vmem:[#allocation2 + $0x8] sm:$0xff]
      %v636 = vld [vmem:[#allocation3] sm:$0xff]
      %v637 = vld [vmem:[#allocation3 + $0x8] sm:$0xff]
      %v638 = vlog2.pop %v636
      %v639 = vmul.f32 %v638, 0.6931472
      %v640 = vlog2.pop %v637
      %v641 = vmul.f32 %v640, 0.6931472
      %v642 = vadd.f32 %v634, %v639
      %v643 = vadd.f32 %v635, %v641
      %v644 = vsub.f32 %v642, %v632
      %v645 = vsub.f32 %v643, %v633
      %v646 = vld [vmem:[#allocation4] sm:$0xff]
      %v647 = vld [vmem:[#allocation4 + $0x8] sm:$0xff]
      %v648 = vld [vmem:[#allocation5] sm:$0xff]
      %v649 = vld [vmem:[#allocation5 + $0x8] sm:$0xff]
      %v650 = vlog2.pop %v648
      %v651 = vmul.f32 %v650, 0.6931472
      %v652 = vlog2.pop %v649
      %v653 = vmul.f32 %v652, 0.6931472
      %v654 = vadd.f32 %v646, %v651
      %v655 = vadd.f32 %v647, %v653
      %v656 = vsub.f32 %v654, %v632
      %v657 = vsub.f32 %v655, %v633
      %vm658 = vcmp.lt.s32.totalorder %v172, 8
      %vm659 = vcmp.lt.s32.totalorder %v173, 8
      %v660 = vsel %vm658, %v644, 0.0
      %v661 = vsel %vm659, %v645, 0.0
      %v662 = vsel %vm658, %v656, 0.0
      %v663 = vsel %vm659, %v657, 0.0
      %664 = vst.msk [vmem:[%s4] sm:$0xff] %vm554, %v660
      %665 = vst.msk [vmem:[%s4 + $0x8] sm:$0xff] %vm554, %v661
      %668 = vrot.lane.b32.xlu0 %v662, 1
      %v669 = vpop.permute.xlu0 %668
      %670 = vrot.lane.b32.xlu0 %v663, 1
      %v671 = vpop.permute.xlu0 %670
      %vm674 = vcmask 15368
      %675 = vst.msk [vmem:[%s4] sm:$0xff] %vm674, %v669
      %676 = vst.msk [vmem:[%s4 + $0x8] sm:$0xff] %vm674, %v671
    $region41: #{tpu_custom_call.1} parent=1 // pred_fallthru
      _
    // Predicated region
    $region42: #{tpu_custom_call.1} parent=1 // pred_check
      _
    $region43: #{tpu_custom_call.1} parent=1 // pred_check_branch
      %678 = sbr.rel (0) target = $region45
    $region44: #{tpu_custom_call.1} parent=1 // pred_region
      _
    $region45: #{tpu_custom_call.1} parent=1 // pred_fallthru
      _
    // Predicated region
    $region46: #{tpu_custom_call.1} parent=1 // pred_check
      _
    $region47: #{tpu_custom_call.1} parent=1 // pred_check_branch
      %680 = sbr.rel (0) target = $region49
    $region48: #{tpu_custom_call.1} parent=1 // pred_region
      _
    $region49: #{tpu_custom_call.1} parent=1 // pred_fallthru
      _
    %681 = vsyncpa [#allocation10], 1
    %682 = vsyncpa [#allocation12], 1
    %683 = vsyncpa [#allocation15], 1

</llo_original>
